<compile_context>
chip_gen: v7x
topology: tpu7x:2x2x1
jax: 0.10.0
libtpu: 0.0.40
codegen_flags: <defaults>
</compile_context>

<pallas_src>
import math

import jax
import jax.numpy as jnp
from jax.experimental import pallas as pl
from jax.experimental.pallas import tpu as pltpu


def _round_up(v, m):
    return (v + m - 1) // m * m


def _cdiv(a, b):
    return -(-a // b)


def _sublane_multiple(dtype):
    # Rows per packed vreg sublane group: f32 -> 8, bf16 -> 16, int8/fp8 -> 32.
    return max(8, 32 // max(1, jnp.dtype(dtype).itemsize))


def _device_caps():
    """Generation-aware tile caps and VMEM ceiling.

    v7x has 64 MiB physical VMEM per TensorCore (keep the scoped limit well
    under it); v5e/v6e have 128 MiB.  Unknown devices fall back to the
    conservative v7x-like limits so we never overshoot physical VMEM.
    """
    try:
        vmem_phys = int(pltpu.get_tpu_info().vmem_capacity_bytes)
    except Exception:
        vmem_phys = 64 * 1024 * 1024
    if vmem_phys <= 72 * 1024 * 1024:
        # v7x-like: 64 MiB physical; leave headroom for compiler scratch.
        return dict(vmem_ceiling=44 * 1024 * 1024, cap_m=1024, cap_n=1024, cap_k=512)
    # v5e / v6e: 128 MiB physical; large tiles push toward the MXU roofline.
    return dict(vmem_ceiling=100 * 1024 * 1024, cap_m=1024, cap_n=1024, cap_k=1024)


def _vmem_footprint(tm, tn, tk, in_item, w_item, out_item):
    """Exact per-step VMEM bytes with double-buffered inputs/outputs."""
    return (2 * tm * tk * in_item      # LHS tiles, double-buffered
            + 2 * tk * tn * w_item     # weight tiles, double-buffered
            + 2 * 1 * tn * 4           # effective-bias tile (f32), double-buffered
            + 2 * tm * tn * out_item   # output tiles, double-buffered
            + tm * tn * 4)             # f32 accumulator scratch


def _select_nk_tiles(K, d_out, in_item, w_item, out_item, caps):
    """Choose the N/K tiles from weight-side shapes only (cacheable)."""
    tn = min(caps['cap_n'], _round_up(d_out, 128))
    tk = min(caps['cap_k'], _round_up(K, 128))
    # Budget against the largest M tile we might ever pick so the padded
    # weight layout never has to change with M.
    while (_vmem_footprint(caps['cap_m'], tn, tk, in_item, w_item, out_item) * 1.25
           > caps['vmem_ceiling']):
        if tk >= tn and tk > 128:
            tk //= 2
        elif tn > 128:
            tn //= 2
        elif tk > 128:
            tk //= 2
        else:
            break
    return tn, tk


def _select_m_tile(M, K, d_out, tn, tk, in_item, w_item, out_item, caps, sub_m):
    tm = min(caps['cap_m'], _round_up(M, sub_m))
    # Shrink tm (only) if the total per-step footprint overshoots the ceiling.
    while (tm > sub_m and
           _vmem_footprint(tm, tn, tk, in_item, w_item, out_item) * 1.25
           > caps['vmem_ceiling']):
        tm = max(sub_m, _round_up(tm // 2, sub_m))
    # Megacore (v7x): avoid collapsing a non-trivial problem onto a single
    # (i, j) tile, otherwise the second TensorCore idles.  Near-neutral on
    # single-TC chips (v5e/v6e).
    if (_cdiv(M, tm) == 1 and _cdiv(d_out, tn) == 1
            and M >= 2 * sub_m and M * K * d_out >= 8 * 1024 * 1024):
        tm = _round_up(_cdiv(M, 2), sub_m)
    return tm


# --------------------------------------------------------------------------- #
# Kernel: tiled  out = xn @ wn + bias_eff  with f32 accumulation.
# --------------------------------------------------------------------------- #
def _matmul_bias_kernel(x_ref, w_ref, b_ref, o_ref, acc_ref):
    k = pl.program_id(2)

    @pl.when(k == 0)
    def _init():
        acc_ref[...] = jnp.zeros_like(acc_ref)

    # Native-dtype operands straight to the MXU, f32 accumulate.
    acc_ref[...] += jnp.dot(x_ref[...], w_ref[...],
                            preferred_element_type=jnp.float32)

    @pl.when(k == pl.num_programs(2) - 1)
    def _store():
        # b_ref is a [1, tn] tile of the effective bias (bias + pooled term);
        # the broadcast-add is cheap VPU filler under the MXU.
        o_ref[...] = (acc_ref[...] + b_ref[...].astype(jnp.float32)
                      ).astype(o_ref.dtype)


def _tiled_matmul_bias(xn, params, bias_eff, out_dtype):
    """out[:M, :Dout] = xn @ wn_padded + bias_eff, tiled/padded for the TPU."""
    M, K = xn.shape
    assert K == params['K']
    wn = params['wn']
    d_out = params['d_out']
    k_pad, n_pad = params['k_pad'], params['n_pad']
    tn, tk = params['tn'], params['tk']
    caps = params['caps']

    in_item = jnp.dtype(xn.dtype).itemsize
    w_item = jnp.dtype(wn.dtype).itemsize
    out_item = jnp.dtype(out_dtype).itemsize
    sub_m = _sublane_multiple(out_dtype)           # dtype-aware sublane rounding

    tm = _select_m_tile(M, K, d_out, tn, tk, in_item, w_item, out_item, caps, sub_m)
    m_pad = _round_up(M, tm)

    # Zero padding keeps the matmul exact; padded rows/cols are sliced off.
    if (m_pad, k_pad) != (M, K):
        xn = jnp.pad(xn, ((0, m_pad - M), (0, k_pad - K)))
    if n_pad != d_out:
        bias_eff = jnp.pad(bias_eff, ((0, 0), (0, n_pad - d_out)))

    grid = (m_pad // tm, n_pad // tn, k_pad // tk)

    footprint = _vmem_footprint(tm, tn, tk, in_item, w_item, out_item)
    vmem_limit = int(min(caps['vmem_ceiling'],
                         max(8 * 1024 * 1024, int(footprint * 1.3) + (2 << 20))))

    cost = pl.CostEstimate(
        flops=2 * m_pad * k_pad * n_pad,
        transcendentals=0,
        bytes_accessed=(m_pad * k_pad * in_item + k_pad * n_pad * w_item
                        + n_pad * 4 + m_pad * n_pad * out_item),
    )

    out = pl.pallas_call(
        _matmul_bias_kernel,
        out_shape=jax.ShapeDtypeStruct((m_pad, n_pad), out_dtype),
        grid_spec=pltpu.PrefetchScalarGridSpec(
            num_scalar_prefetch=0,
            grid=grid,
            in_specs=[
                pl.BlockSpec((tm, tk), lambda i, j, k: (i, k)),
                pl.BlockSpec((tk, tn), lambda i, j, k: (k, j)),
                pl.BlockSpec((1, tn), lambda i, j, k: (0, j)),
            ],
            out_specs=pl.BlockSpec((tm, tn), lambda i, j, k: (i, j)),
            scratch_shapes=[pltpu.VMEM((tm, tn), jnp.float32)],
        ),
        compiler_params=pltpu.CompilerParams(
            dimension_semantics=("parallel", "parallel", "arbitrary"),
            vmem_limit_bytes=vmem_limit,
        ),
        cost_estimate=cost,
    )(xn, wn, bias_eff)

    if (m_pad, n_pad) != (M, d_out):
        out = out[:M, :d_out]
    return out


# --------------------------------------------------------------------------- #
# Parameter preparation (hoisted out of the per-call path).
# --------------------------------------------------------------------------- #
def prepare_uniform_linear(weight, bias, d_in, *, ord_out=1, cfg='default',
                           normalize=True, x_dtype=None):
    """Split + pad the weight ONCE; reuse the result across forward calls."""
    assert cfg in ('default', 'light')
    d_tot, d_out = weight.shape
    if cfg == 'default':
        assert d_tot == d_in * (ord_out + 1)
        wn = weight[:-d_in]
        wp = weight[-d_in:]
    else:
        assert d_tot == d_in * ord_out
        wn = weight
        wp = None
    K = wn.shape[0]

    caps = _device_caps()
    x_dtype = jnp.dtype(weight.dtype if x_dtype is None else x_dtype)
    in_item = x_dtype.itemsize
    w_item = jnp.dtype(weight.dtype).itemsize
    out_item = in_item

    tn, tk = _select_nk_tiles(K, d_out, in_item, w_item, out_item, caps)
    n_pad = _round_up(d_out, tn)
    k_pad = _round_up(K, tk)
    if (k_pad, n_pad) != (K, d_out):
        wn = jnp.pad(wn, ((0, k_pad - K), (0, n_pad - d_out)))

    if bias is None:
        b = jnp.zeros((1, d_out), jnp.float32)
    else:
        b = bias.reshape(1, d_out).astype(jnp.float32)

    return dict(wn=wn, wp=wp, bias=b, d_in=d_in, d_out=d_out, K=K,
                k_pad=k_pad, n_pad=n_pad, tn=tn, tk=tk,
                ord_out=ord_out, cfg=cfg, normalize=normalize, caps=caps)


def uniform_linear_apply(params, x, indices=None):
    """Forward pass with pre-split/pre-padded weights (ord_in == 1)."""
    assert x.ndim == 2
    N, d_in = x.shape
    assert d_in == params['d_in']
    ord_out = params['ord_out']

    # Non-pool activations.
    if ord_out == 1:
        assert indices is None
        xn = x
    else:
        assert indices is not None and indices.ndim == 2 and indices.shape[1] == ord_out
        # TODO(synk): for very large B, stream this row-gather into the matmul
        # via scalar-prefetched indices + in-kernel DMA instead of
        # materializing [B, ord_out*d_in] in HBM first.
        xn = x[indices].reshape(indices.shape[0], ord_out * d_in)

    # Effective bias = bias + pool(x) @ W_pool, computed once over ALL N rows
    # (a tiny [1, d_out] vector), so the kernel never spends an MXU pass on a
    # rank-1 matmul and tiling over M cannot change the pooling semantics.
    bias_eff = params['bias']
    if params['wp'] is not None:
        pooled = jnp.sum(x.astype(jnp.float32), axis=0, keepdims=True)
        if params['normalize']:
            pooled = pooled * (1.0 / N)
        bias_eff = bias_eff + pooled @ params['wp'].astype(jnp.float32)

    return _tiled_matmul_bias(xn, params, bias_eff, out_dtype=x.dtype)


def uniform_linear(x, weight, bias, *, ord_out=1, indices=None,
                   cfg='default', normalize=True):
    """One-shot convenience path (re-splits/pads the weight each call).

    For repeated calls with the same weight, call prepare_uniform_linear()
    once and uniform_linear_apply() per call.
    """
    params = prepare_uniform_linear(weight, bias, x.shape[1], ord_out=ord_out,
                                    cfg=cfg, normalize=normalize, x_dtype=x.dtype)
    return uniform_linear_apply(params, x, indices=indices)


def xavier_normal(key, shape, dtype=jnp.float32):
    fan_in, fan_out = shape
    std = math.sqrt(2.0 / (fan_in + fan_out))
    return std * jax.random.normal(key, shape, dtype)


if __name__ == "__main__":
    key = jax.random.PRNGKey(0)
    k_x, k_w1, k_wk, k_wl, k_idx = jax.random.split(key, 5)

    N, d_in, d_out = 8, 32, 32
    x = jax.random.normal(k_x, (N, d_in), jnp.float32)
    bias = jnp.zeros((d_out,), jnp.float32)   # nn.init.constant_(bias, 0.0)

    # ---- 1 -> 1, cfg='default', normalize=True (prepared/cached weights) -- #
    w_11 = xavier_normal(k_w1, (d_in * 2, d_out))
    p_11 = prepare_uniform_linear(w_11, bias, d_in, ord_out=1,
                                  cfg='default', normalize=True, x_dtype=x.dtype)
    y_11 = uniform_linear_apply(p_11, x)
    jax.block_until_ready(y_11)
    ref_11 = (x @ w_11[:-d_in]
              + jnp.mean(x, axis=0, keepdims=True) @ w_11[-d_in:]
              + bias[None, :])
    assert y_11.shape == (N, d_out)
    assert jnp.allclose(y_11, ref_11, atol=1e-2, rtol=1e-2)

    # ---- 1 -> k (k=2), cfg='default', normalize=True --------------------- #
    k_ord, B = 2, 8
    w_1k = xavier_normal(k_wk, (d_in * (k_ord + 1), d_out))
    indices = jax.random.randint(k_idx, (B, k_ord), 0, N)
    y_1k = uniform_linear(x, w_1k, bias, ord_out=k_ord, indices=indices,
                          cfg='default', normalize=True)
    jax.block_until_ready(y_1k)
    xn_ref = x[indices].reshape(B, k_ord * d_in)
    ref_1k = (xn_ref @ w_1k[:-d_in]
              + jnp.mean(x, axis=0, keepdims=True) @ w_1k[-d_in:]
              + bias[None, :])
    assert y_1k.shape == (B, d_out)
    assert jnp.allclose(y_1k, ref_1k, atol=1e-2, rtol=1e-2)

    # ---- 1 -> 1, cfg='light' (no pool term) ------------------------------ #
    w_lt = xavier_normal(k_wl, (d_in, d_out))
    y_lt = uniform_linear(x, w_lt, bias, ord_out=1, cfg='light', normalize=True)
    jax.block_until_ready(y_lt)
    ref_lt = x @ w_lt + bias[None, :]
    assert y_lt.shape == (N, d_out)
    assert jnp.allclose(y_lt, ref_lt, atol=1e-2, rtol=1e-2)

    # ---- 1 -> 1, cfg='default', bf16 (dtype-aware sublane rounding) ------ #
    x_bf = x.astype(jnp.bfloat16)
    w_bf = w_11.astype(jnp.bfloat16)
    y_bf = uniform_linear(x_bf, w_bf, bias, ord_out=1, cfg='default',
                          normalize=True)
    jax.block_until_ready(y_bf)
    ref_bf = (x_bf.astype(jnp.float32) @ w_bf[:-d_in].astype(jnp.float32)
              + jnp.mean(x_bf.astype(jnp.float32), axis=0, keepdims=True)
              @ w_bf[-d_in:].astype(jnp.float32)
              + bias[None, :])
    assert y_bf.shape == (N, d_out)
    assert jnp.allclose(y_bf.astype(jnp.float32), ref_bf, atol=1e-1, rtol=1e-1)

    print("KERNEL_OK")
</pallas_src>

<mosaic_0001>
module attributes {stable_mosaic.version = 11 : i64} {
  func.func @_matmul_bias_kernel(%arg0: i32, %arg1: i32, %arg2: i32, %arg3: memref<8x128xf32, #tpu.memory_space<vmem>>, %arg4: memref<128x128xf32, #tpu.memory_space<vmem>>, %arg5: memref<1x128xf32, #tpu.memory_space<vmem>>, %arg6: memref<8x128xf32, #tpu.memory_space<vmem>>, %arg7: memref<8x128xf32, #tpu.memory_space<vmem>>) attributes {dimension_semantics = [#tpu.dimension_semantics<parallel>, #tpu.dimension_semantics<parallel>, #tpu.dimension_semantics<arbitrary>], iteration_bounds = array<i64: 1, 1, 1>, scalar_prefetch = 0 : i64, scratch_operands = 1 : i64, tpu.core_type = #tpu.core_type<tc>, window_params = [{transform_indices = @transform_0, window_bounds = array<i64: 8, 128>}, {transform_indices = @transform_1, window_bounds = array<i64: 128, 128>}, {transform_indices = @transform_2, window_bounds = array<i64: 1, 128>}, {transform_indices = @transform_3, window_bounds = array<i64: 8, 128>}]} {
    %c0_i32 = arith.constant 0 : i32
    %0 = arith.cmpi eq, %arg2, %c0_i32 : i32
    %1 = arith.extui %0 : i1 to i32
    %c0_i32_0 = arith.constant 0 : i32
    %2 = arith.cmpi ne, %1, %c0_i32_0 : i32
    scf.if %2 {
      %cst_10 = arith.constant 0.000000e+00 : f32
      %12 = vector.broadcast %cst_10 : f32 to vector<8x128xf32>
      %c0_11 = arith.constant 0 : index
      %c0_12 = arith.constant 0 : index
      %13 = vector.load %arg7[%c0_11, %c0_12] : memref<8x128xf32, #tpu.memory_space<vmem>>, vector<8x128xf32>
      tpu.vector_store %arg7[%c0_11, %c0_12], %12 {strides = array<i32>} : memref<8x128xf32, #tpu.memory_space<vmem>>, vector<8x128xf32>,
    } else {
    }
    %c0 = arith.constant 0 : index
    %c0_1 = arith.constant 0 : index
    %3 = vector.load %arg7[%c0, %c0_1] : memref<8x128xf32, #tpu.memory_space<vmem>>, vector<8x128xf32>
    %c0_2 = arith.constant 0 : index
    %c0_3 = arith.constant 0 : index
    %4 = vector.load %arg3[%c0_2, %c0_3] : memref<8x128xf32, #tpu.memory_space<vmem>>, vector<8x128xf32>
    %c0_4 = arith.constant 0 : index
    %c0_5 = arith.constant 0 : index
    %5 = vector.load %arg4[%c0_4, %c0_5] : memref<128x128xf32, #tpu.memory_space<vmem>>, vector<128x128xf32>
    %cst = arith.constant dense<0.000000e+00> : vector<8x128xf32>
    %6 = tpu.matmul %4, %5, %cst {dimension_numbers = #tpu.dot_dimension_numbers<[1], [0], [0], [1], [0, 0, 1, 1], [], []>} : vector<8x128xf32>, vector<128x128xf32>, vector<8x128xf32> -> vector<8x128xf32>
    %7 = arith.addf %3, %6 : vector<8x128xf32>
    %c0_6 = arith.constant 0 : index
    %c0_7 = arith.constant 0 : index
    %8 = vector.load %arg7[%c0_6, %c0_7] : memref<8x128xf32, #tpu.memory_space<vmem>>, vector<8x128xf32>
    tpu.vector_store %arg7[%c0_6, %c0_7], %7 {strides = array<i32>} : memref<8x128xf32, #tpu.memory_space<vmem>>, vector<8x128xf32>,
    %c0_i32_8 = arith.constant 0 : i32
    %9 = arith.cmpi eq, %arg2, %c0_i32_8 : i32
    %10 = arith.extui %9 : i1 to i32
    %c0_i32_9 = arith.constant 0 : i32
    %11 = arith.cmpi ne, %10, %c0_i32_9 : i32
    scf.if %11 {
      %c0_10 = arith.constant 0 : index
      %c0_11 = arith.constant 0 : index
      %12 = vector.load %arg7[%c0_10, %c0_11] : memref<8x128xf32, #tpu.memory_space<vmem>>, vector<8x128xf32>
      %c0_12 = arith.constant 0 : index
      %c0_13 = arith.constant 0 : index
      %13 = vector.load %arg5[%c0_12, %c0_13] : memref<1x128xf32, #tpu.memory_space<vmem>>, vector<1x128xf32>
      %14 = vector.broadcast %13 : vector<1x128xf32> to vector<8x128xf32>
      %15 = arith.addf %12, %14 : vector<8x128xf32>
      %c0_14 = arith.constant 0 : index
      %c0_15 = arith.constant 0 : index
      %16 = vector.load %arg6[%c0_14, %c0_15] : memref<8x128xf32, #tpu.memory_space<vmem>>, vector<8x128xf32>
      tpu.vector_store %arg6[%c0_14, %c0_15], %15 {strides = array<i32>} : memref<8x128xf32, #tpu.memory_space<vmem>>, vector<8x128xf32>,
    } else {
    }
    return
  }
  func.func @transform_0(%arg0: i32, %arg1: i32, %arg2: i32) -> (i32, i32) {
    %c0_i32 = arith.constant 0 : i32
    return %arg0, %arg2 : i32, i32
  }
  func.func @transform_1(%arg0: i32, %arg1: i32, %arg2: i32) -> (i32, i32) {
    %c0_i32 = arith.constant 0 : i32
    return %arg2, %arg1 : i32, i32
  }
  func.func @transform_2(%arg0: i32, %arg1: i32, %arg2: i32) -> (i32, i32) {
    %c0_i32 = arith.constant 0 : i32
    %c0_i32_0 = arith.constant 0 : i32
    return %c0_i32, %arg1 : i32, i32
  }
  func.func @transform_3(%arg0: i32, %arg1: i32, %arg2: i32) -> (i32, i32) {
    %c0_i32 = arith.constant 0 : i32
    return %arg0, %arg1 : i32, i32
  }
}

</mosaic_0001>

<llo_original>
// kernel: tpu_custom_call.1
$region0: #{tpu_custom_call.1}
  #allocation0 [shape = 'u32[]', space=smem, size = 0x4, offset = 0x4, fixed_abs, tag = 'smem constant byte address 0x4 - core index']
  #allocation1 [shape = 'u32[144,128]{1,0:T(1,128)}', space=vmem, size = 0x12000, scoped, tag = 'internal scratch']
  #allocation2 [shape = 'f32[8,128]{1,0:T(8,128)}', space=vmem, size = 0x1000, scoped, tag = 'scratch operand']
  %s0 = inlined_call_operand.hbm [shape: f32[8,128], index: 0, kind: input, shape index: {}]
  %s1 = inlined_call_operand.hbm [shape: f32[128,128], index: 1, kind: input, shape index: {}]
  %s2 = inlined_call_operand.vmem [shape: f32[1,128], index: 2, kind: input, shape index: {}]
  %s3 = inlined_call_operand.hbm [shape: f32[8,128], index: 3, kind: output, shape index: {}]
  %s4 = sld [smem:[#allocation0]]
  $region38: #{tpu_custom_call.1} parent=0
    _
  %s6 = ssub.s32 1, %s4
  %s7 = scalar_select 0, %s6, %s4
  $region1: #{tpu_custom_call.1} parent=0
    #allocation3 [shape = 'u8[4096]{0}', space=vmem, size = 0x1000, scoped, tag = 'input window, operand 0, single buffered']
    #allocation4 [shape = 's32[1]{0}', space=sflag, size = 0x4, scoped, tag = 'scoped memory for tpu_custom_call.1']
    #allocation5 [shape = 's32[1]{0}', space=sflag, size = 0x4, scoped, tag = 'scoped memory for tpu_custom_call.1']
    #allocation6 [shape = 'u8[65536]{0}', space=vmem, size = 0x10000, scoped, tag = 'input window, operand 1, single buffered']
    #allocation7 [shape = 's32[1]{0}', space=sflag, size = 0x4, scoped, tag = 'scoped memory for tpu_custom_call.1']
    #allocation8 [shape = 'u8[4096]{0}', space=vmem, size = 0x1000, scoped, tag = 'output window, operand 0, single buffered']
    %8 = vsyncpa [#allocation4], 0
    %9 = vsyncpa [#allocation7], 0
    %10 = vsyncpa [#allocation5], 0
    // Predicated region
    $region2: #{tpu_custom_call.1} parent=1 // pred_check
      _
    $region3: #{tpu_custom_call.1} parent=1 // pred_check_branch
      %12 = sbr.rel (0) target = $region5
    $region4: #{tpu_custom_call.1} parent=1 // pred_region
      %s14 = ssub.s32 128, 128
      %15 = vsyncadd [#allocation4], %s14
      %s17 = sshll.u32 [#allocation3], 4
      %s18 = int_to_ptr.vmem [resolvable:$true] %s17
      %20 = dma.hbm_to_vmem [thread:$0]  %s0, 128, %s18, [#allocation4]
    $region5: #{tpu_custom_call.1} parent=1 // pred_fallthru
      _
    // Predicated region
    $region6: #{tpu_custom_call.1} parent=1 // pred_check
      _
    $region7: #{tpu_custom_call.1} parent=1 // pred_check_branch
      %22 = sbr.rel (0) target = $region9
    $region8: #{tpu_custom_call.1} parent=1 // pred_region
      %s24 = ssub.s32 2048, 2048
      %25 = vsyncadd [#allocation7], %s24
      %s26 = sshll.u32 [#allocation6], 4
      %s27 = int_to_ptr.vmem [resolvable:$true] %s26
      %32 = dma.hbm_to_vmem [thread:$0]  %s1, 2048, %s27, [#allocation7], 128, 128, 8
    $region9: #{tpu_custom_call.1} parent=1 // pred_fallthru
      _
    // Predicated region
    $region10: #{tpu_custom_call.1} parent=1 // pred_check
      _
    $region11: #{tpu_custom_call.1} parent=1 // pred_check_branch
      %34 = sbr.rel (0) target = $region13
    $region12: #{tpu_custom_call.1} parent=1 // pred_region
      _
    $region13: #{tpu_custom_call.1} parent=1 // pred_fallthru
      _
    // Predicated region
    $region14: #{tpu_custom_call.1} parent=1 // pred_check
      _
    $region15: #{tpu_custom_call.1} parent=1 // pred_check_branch
      %36 = sbr.rel (0) target = $region17
    $region16: #{tpu_custom_call.1} parent=1 // pred_region
      %37 = dma.done [#allocation4], 128
    $region17: #{tpu_custom_call.1} parent=1 // pred_fallthru
      _
    // Predicated region
    $region18: #{tpu_custom_call.1} parent=1 // pred_check
      _
    $region19: #{tpu_custom_call.1} parent=1 // pred_check_branch
      %39 = sbr.rel (0) target = $region21
    $region20: #{tpu_custom_call.1} parent=1 // pred_region
      %40 = dma.done [#allocation7], 2048
    $region21: #{tpu_custom_call.1} parent=1 // pred_fallthru
      _
    %p41 = scmp.eq.s32.totalorder 0, 0
    // Predicated region
    $region22: #{tpu_custom_call.1} parent=1 // pred_check
      %p42 = pneg %p41
    $region23: #{tpu_custom_call.1} parent=1 // pred_check_branch
      %44 = sbr.rel (%p42) target = $region25
    $region24: #{tpu_custom_call.1} parent=1 // pred_region
      %45 = vst [vmem:[#allocation2] sm:$0xff] 0.0
    $region25: #{tpu_custom_call.1} parent=1 // pred_fallthru
      _
    %v46 = vld [vmem:[#allocation2] sm:$0xff]
    %v47 = vld [vmem:[#allocation3] sm:$0xff]
    %v48 = vld [vmem:[#allocation6] sm:$0xff]
    %v49 = vld [vmem:[#allocation6 + $0x8] sm:$0xff]
    %v50 = vld [vmem:[#allocation6 + $0x10] sm:$0xff]
    %v51 = vld [vmem:[#allocation6 + $0x18] sm:$0xff]
    %v52 = vld [vmem:[#allocation6 + $0x20] sm:$0xff]
    %v53 = vld [vmem:[#allocation6 + $0x28] sm:$0xff]
    %v54 = vld [vmem:[#allocation6 + $0x30] sm:$0xff]
    %v55 = vld [vmem:[#allocation6 + $0x38] sm:$0xff]
    %v56 = vld [vmem:[#allocation6 + $0x40] sm:$0xff]
    %v57 = vld [vmem:[#allocation6 + $0x48] sm:$0xff]
    %v58 = vld [vmem:[#allocation6 + $0x50] sm:$0xff]
    %v59 = vld [vmem:[#allocation6 + $0x58] sm:$0xff]
    %v60 = vld [vmem:[#allocation6 + $0x60] sm:$0xff]
    %v61 = vld [vmem:[#allocation6 + $0x68] sm:$0xff]
    %v62 = vld [vmem:[#allocation6 + $0x70] sm:$0xff]
    %v63 = vld [vmem:[#allocation6 + $0x78] sm:$0xff]
    %64 = vmatprep.subr.mxu0 0.0
    %65 = vmatpush1.msra.mxu0 %v48
    %66 = vmatprep.subr.mxu0 0.0
    %67 = vmatpush1.msra.mxu0 %v49
    %68 = vmatprep.subr.mxu0 0.0
    %69 = vmatpush1.msra.mxu0 %v50
    %70 = vmatprep.subr.mxu0 0.0
    %71 = vmatpush1.msra.mxu0 %v51
    %72 = vmatprep.subr.mxu0 0.0
    %73 = vmatpush1.msra.mxu0 %v52
    %74 = vmatprep.subr.mxu0 0.0
    %75 = vmatpush1.msra.mxu0 %v53
    %76 = vmatprep.subr.mxu0 0.0
    %77 = vmatpush1.msra.mxu0 %v54
    %78 = vmatprep.subr.mxu0 0.0
    %79 = vmatpush1.msra.mxu0 %v55
    %80 = vmatprep.subr.mxu0 0.0
    %81 = vmatpush1.msra.mxu0 %v56
    %82 = vmatprep.subr.mxu0 0.0
    %83 = vmatpush1.msra.mxu0 %v57
    %84 = vmatprep.subr.mxu0 0.0
    %85 = vmatpush1.msra.mxu0 %v58
    %86 = vmatprep.subr.mxu0 0.0
    %87 = vmatpush1.msra.mxu0 %v59
    %88 = vmatprep.subr.mxu0 0.0
    %89 = vmatpush1.msra.mxu0 %v60
    %90 = vmatprep.subr.mxu0 0.0
    %91 = vmatpush1.msra.mxu0 %v61
    %92 = vmatprep.subr.mxu0 0.0
    %93 = vmatpush1.msra.mxu0 %v62
    %94 = vmatprep.subr.mxu0 0.0
    %95 = vmatpush1.msra.mxu0 %v63
    %96 = vmatprep.subr.mxu0 0.0
    %97 = vmatpush1.msra.mxu0 0.0
    %98 = vmatprep.subr.mxu0 0.0
    %99 = vmatpush1.msra.mxu0 0.0
    %100 = vmatprep.subr.mxu0 0.0
    %101 = vmatpush1.msra.mxu0 0.0
    %102 = vmatprep.subr.mxu0 0.0
    %103 = vmatpush1.msra.mxu0 0.0
    %104 = vmatprep.subr.mxu0 0.0
    %105 = vmatpush1.msra.mxu0 0.0
    %106 = vmatprep.subr.mxu0 0.0
    %107 = vmatpush1.msra.mxu0 0.0
    %108 = vmatprep.subr.mxu0 0.0
    %109 = vmatpush1.msra.mxu0 0.0
    %110 = vmatprep.subr.mxu0 0.0
    %111 = vmatpush1.msra.mxu0 0.0
    %112 = vmatprep.subr.mxu0 0.0
    %113 = vmatpush1.msra.mxu0 0.0
    %114 = vmatprep.subr.mxu0 0.0
    %115 = vmatpush1.msra.mxu0 0.0
    %116 = vmatprep.subr.mxu0 0.0
    %117 = vmatpush1.msra.mxu0 0.0
    %118 = vmatprep.subr.mxu0 0.0
    %119 = vmatpush1.msra.mxu0 0.0
    %120 = vmatprep.subr.mxu0 0.0
    %121 = vmatpush1.msra.mxu0 0.0
    %122 = vmatprep.subr.mxu0 0.0
    %123 = vmatpush1.msra.mxu0 0.0
    %124 = vmatprep.subr.mxu0 0.0
    %125 = vmatpush1.msra.mxu0 0.0
    %126 = vmatprep.subr.mxu0 0.0
    %127 = vmatpush1.msra.mxu0 0.0
    %128 = vmatprep.mubr.f32.mxu0 0.0
    %129 = vmatmul.mubr.f32.gmra.mrb[0].mxu0 %v47
    %v130 = vpop.f32.mrb[0].mxu0
    %v131 = vadd.f32 0.0, %v130
    %v132 = vpop.f32.mrb[0].mxu0
    %133 = vdwg.mxu0
    %v134 = vadd.f32 %v46, %v131
    %135 = vst [vmem:[#allocation2] sm:$0xff] %v134
    // Predicated region
    $region26: #{tpu_custom_call.1} parent=1 // pred_check
      %p136 = pneg %p41
    $region27: #{tpu_custom_call.1} parent=1 // pred_check_branch
      %138 = sbr.rel (%p136) target = $region29
    $region28: #{tpu_custom_call.1} parent=1 // pred_region
      %v139 = vld [vmem:[#allocation2] sm:$0xff]
      %v140 = vld [vmem:[%s2] sm:$0x1]
      %v142 = vlaneseq
      %v143 = vshrl.u32 %v142, 7
      %v144 = vsub.s32 0, %v143
      %v145 = vrot.slane %v140, %v144
      %v147 = vadd.f32 %v139, %v145
      %148 = vst [vmem:[#allocation8] sm:$0xff] %v147
    $region29: #{tpu_custom_call.1} parent=1 // pred_fallthru
      _
    // Predicated region
    $region30: #{tpu_custom_call.1} parent=1 // pred_check
      _
    $region31: #{tpu_custom_call.1} parent=1 // pred_check_branch
      %150 = sbr.rel (0) target = $region33
    $region32: #{tpu_custom_call.1} parent=1 // pred_region
      %s152 = ssub.s32 128, 128
      %153 = vsyncadd [#allocation5], %s152
      %s155 = sshll.u32 [#allocation8], 4
      %s156 = int_to_ptr.vmem [resolvable:$true] %s155
      %158 = dma.vmem_to_hbm [thread:$0]  %s156, 128, %s3, [#allocation5]
    $region33: #{tpu_custom_call.1} parent=1 // pred_fallthru
      _
    // Predicated region
    $region34: #{tpu_custom_call.1} parent=1 // pred_check
      _
    $region35: #{tpu_custom_call.1} parent=1 // pred_check_branch
      %160 = sbr.rel (0) target = $region37
    $region36: #{tpu_custom_call.1} parent=1 // pred_region
      %161 = dma.done [#allocation5], 128
    $region37: #{tpu_custom_call.1} parent=1 // pred_fallthru
      _
    %162 = vsyncpa [#allocation4], 1
    %163 = vsyncpa [#allocation7], 1
    %164 = vsyncpa [#allocation5], 1

</llo_original>
